<compile_context>
chip_gen: v5e
topology: v5e:2x2
jax: 0.10.0
libtpu: 0.0.40
codegen_flags: <defaults>
</compile_context>

<pallas_src>
import functools

import jax
import jax.numpy as jnp
from jax.experimental import pallas as pl
from jax.experimental.pallas import tpu as pltpu


def _round_up(x, m):
    return ((x + m - 1) // m) * m


# ---------------------------------------------------------------------------
# Fused Pallas kernel: whole QNetworkDense forward for one batch tile
# ---------------------------------------------------------------------------
def _qnet_dense_kernel(x_ref, fw_ref, fb_ref,
                       a1w_ref, a1b_ref, a2w_ref, a2b_ref,
                       *rest, dueling):
    if dueling:
        v1w_ref, v1b_ref, v2w_ref, v2b_ref, o_ref = rest
    else:
        (o_ref,) = rest

    x = x_ref[...]

    # feature_fc + ELU
    h = jnp.dot(x, fw_ref[...], preferred_element_type=jnp.float32) + fb_ref[...]
    h = jnp.where(h > 0.0, h, jnp.exp(h) - 1.0)  # ELU(alpha=1)

    # advantage head
    a = jnp.dot(h, a1w_ref[...], preferred_element_type=jnp.float32) + a1b_ref[...]
    a = jnp.maximum(a, 0.0)
    a = jnp.dot(a, a2w_ref[...], preferred_element_type=jnp.float32) + a2b_ref[...]

    if dueling:
        # value head + dueling combine, all fused in the same kernel
        v = jnp.dot(h, v1w_ref[...], preferred_element_type=jnp.float32) + v1b_ref[...]
        v = jnp.maximum(v, 0.0)
        v = jnp.dot(v, v2w_ref[...], preferred_element_type=jnp.float32) + v2b_ref[...]
        a = v + a - jnp.mean(a, axis=1, keepdims=True)

    o_ref[...] = a.astype(o_ref.dtype)


def qnetwork_dense_forward(params, state, *, dueling=False, tile_m=1024):
    """state: (B, o_dim) float32. Returns (B, u_dim)."""
    B, o_dim = state.shape
    u_dim = params["a_fc2_w"].shape[1]

    # Batch-tile size: multiple of 8 (sublane), capped by tile_m; pad B to it.
    tm = min(tile_m, max(8, _round_up(B, 8)))
    Bp = _round_up(B, tm)
    if Bp != B:
        state = jnp.pad(state, ((0, Bp - B), (0, 0)))

    # Operand list: batch-tiled input, then VMEM-resident weights/biases.
    operands = [
        state,
        params["f_w"], params["f_b"].reshape(1, -1),
        params["a_fc1_w"], params["a_fc1_b"].reshape(1, -1),
        params["a_fc2_w"], params["a_fc2_b"].reshape(1, -1),
    ]
    if dueling:
        operands += [
            params["v_fc1_w"], params["v_fc1_b"].reshape(1, -1),
            params["v_fc2_w"], params["v_fc2_b"].reshape(1, -1),
        ]

    in_specs = [pl.BlockSpec((tm, o_dim), lambda i: (i, 0))]
    # Weights/biases: full-array blocks, constant index_map -> stay resident.
    in_specs += [pl.BlockSpec(op.shape, lambda i: (0, 0)) for op in operands[1:]]

    out = pl.pallas_call(
        functools.partial(_qnet_dense_kernel, dueling=dueling),
        out_shape=jax.ShapeDtypeStruct((Bp, u_dim), jnp.float32),
        grid=(Bp // tm,),
        in_specs=in_specs,
        out_specs=pl.BlockSpec((tm, u_dim), lambda i: (i, 0)),
        compiler_params=pltpu.CompilerParams(
            dimension_semantics=("parallel",)),
    )(*operands)

    return out[:B] if Bp != B else out


# ---------------------------------------------------------------------------
# Parameter init (PyTorch nn.Linear-style uniform, distinct key per tensor)
# ---------------------------------------------------------------------------
def init_params(key, o_dim, u_dim, dueling):
    ks = jax.random.split(key, 14)

    def init(k, shape, fan_in):
        bound = 1.0 / jnp.sqrt(fan_in)
        return jax.random.uniform(k, shape, jnp.float32, -bound, bound)

    params = {
        # stored (in, out) so the kernel needs no transposes
        "f_w": init(ks[0], (o_dim, 128), o_dim),
        "f_b": init(ks[1], (128,), o_dim),
        "a_fc1_w": init(ks[2], (128, 128), 128),
        "a_fc1_b": init(ks[3], (128,), 128),
        "a_fc2_w": init(ks[4], (128, u_dim), 128),
        "a_fc2_b": init(ks[5], (u_dim,), 128),
    }
    if dueling:
        params.update({
            "v_fc1_w": init(ks[6], (128, 128), 128),
            "v_fc1_b": init(ks[7], (128,), 128),
            "v_fc2_w": init(ks[8], (128, 1), 128),
            "v_fc2_b": init(ks[9], (1,), 128),
        })
    return params


# ---------------------------------------------------------------------------
# Pure-JAX reference for correctness
# ---------------------------------------------------------------------------
def qnetwork_dense_ref(params, state, dueling=False):
    h = state @ params["f_w"] + params["f_b"]
    h = jnp.where(h > 0.0, h, jnp.exp(h) - 1.0)
    a = jnp.maximum(h @ params["a_fc1_w"] + params["a_fc1_b"], 0.0)
    a = a @ params["a_fc2_w"] + params["a_fc2_b"]
    if dueling:
        v = jnp.maximum(h @ params["v_fc1_w"] + params["v_fc1_b"], 0.0)
        v = v @ params["v_fc2_w"] + params["v_fc2_b"]
        return v + a - jnp.mean(a, axis=1, keepdims=True)
    return a


if __name__ == "__main__":
    B, o_dim, u_dim = 2, 37, 4  # banana-navigation dims; small test batch

    key = jax.random.PRNGKey(0)
    k_param, k_state = jax.random.split(key)
    state = jax.random.normal(k_state, (B, o_dim), jnp.float32)

    for dueling in (False, True):
        params = init_params(k_param, o_dim, u_dim, dueling)
        fwd = jax.jit(functools.partial(qnetwork_dense_forward, dueling=dueling))
        out = jax.block_until_ready(fwd(params, state))
        assert out.shape == (B, u_dim), out.shape
        ref = qnetwork_dense_ref(params, state, dueling=dueling)
        assert jnp.allclose(out, ref, rtol=1e-4, atol=1e-4), (dueling, out, ref)

    print("KERNEL_OK")
</pallas_src>

<mosaic_0001>
module attributes {stable_mosaic.version = 11 : i64} {
  func.func @_qnet_dense_kernel(%arg0: i32, %arg1: memref<8x37xf32, #tpu.memory_space<vmem>>, %arg2: memref<37x128xf32, #tpu.memory_space<vmem>>, %arg3: memref<1x128xf32, #tpu.memory_space<vmem>>, %arg4: memref<128x128xf32, #tpu.memory_space<vmem>>, %arg5: memref<1x128xf32, #tpu.memory_space<vmem>>, %arg6: memref<128x4xf32, #tpu.memory_space<vmem>>, %arg7: memref<1x4xf32, #tpu.memory_space<vmem>>, %arg8: memref<8x4xf32, #tpu.memory_space<vmem>>) attributes {dimension_semantics = [#tpu.dimension_semantics<parallel>], iteration_bounds = array<i64: 1>, scalar_prefetch = 0 : i64, scratch_operands = 0 : i64, tpu.core_type = #tpu.core_type<tc>, window_params = [{transform_indices = @transform_0, window_bounds = array<i64: 8, 37>}, {pipeline_mode = #tpu.pipeline_mode<synchronous>, transform_indices = @transform_1, window_bounds = array<i64: 37, 128>}, {pipeline_mode = #tpu.pipeline_mode<synchronous>, transform_indices = @transform_2, window_bounds = array<i64: 1, 128>}, {pipeline_mode = #tpu.pipeline_mode<synchronous>, transform_indices = @transform_3, window_bounds = array<i64: 128, 128>}, {pipeline_mode = #tpu.pipeline_mode<synchronous>, transform_indices = @transform_4, window_bounds = array<i64: 1, 128>}, {pipeline_mode = #tpu.pipeline_mode<synchronous>, transform_indices = @transform_5, window_bounds = array<i64: 128, 4>}, {pipeline_mode = #tpu.pipeline_mode<synchronous>, transform_indices = @transform_6, window_bounds = array<i64: 1, 4>}, {transform_indices = @transform_7, window_bounds = array<i64: 8, 4>}]} {
    %c0 = arith.constant 0 : index
    %c0_0 = arith.constant 0 : index
    %0 = vector.load %arg1[%c0, %c0_0] : memref<8x37xf32, #tpu.memory_space<vmem>>, vector<8x37xf32>
    %c0_1 = arith.constant 0 : index
    %c0_2 = arith.constant 0 : index
    %1 = vector.load %arg2[%c0_1, %c0_2] : memref<37x128xf32, #tpu.memory_space<vmem>>, vector<37x128xf32>
    %cst = arith.constant dense<0.000000e+00> : vector<8x128xf32>
    %2 = tpu.matmul %0, %1, %cst {dimension_numbers = #tpu.dot_dimension_numbers<[1], [0], [0], [1], [0, 0, 1, 1], [], []>} : vector<8x37xf32>, vector<37x128xf32>, vector<8x128xf32> -> vector<8x128xf32>
    %c0_3 = arith.constant 0 : index
    %c0_4 = arith.constant 0 : index
    %3 = vector.load %arg3[%c0_3, %c0_4] : memref<1x128xf32, #tpu.memory_space<vmem>>, vector<1x128xf32>
    %4 = vector.broadcast %3 : vector<1x128xf32> to vector<8x128xf32>
    %5 = arith.addf %2, %4 : vector<8x128xf32>
    %cst_5 = arith.constant 0.000000e+00 : f32
    %6 = vector.broadcast %cst_5 : f32 to vector<8x128xf32>
    %7 = arith.cmpf ogt, %5, %6 : vector<8x128xf32>
    %8 = math.exp %5 : vector<8x128xf32>
    %cst_6 = arith.constant 1.000000e+00 : f32
    %9 = vector.broadcast %cst_6 : f32 to vector<8x128xf32>
    %10 = arith.subf %8, %9 : vector<8x128xf32>
    %11 = arith.select %7, %5, %10 : vector<8x128xi1>, vector<8x128xf32>
    %c0_7 = arith.constant 0 : index
    %c0_8 = arith.constant 0 : index
    %12 = vector.load %arg4[%c0_7, %c0_8] : memref<128x128xf32, #tpu.memory_space<vmem>>, vector<128x128xf32>
    %cst_9 = arith.constant dense<0.000000e+00> : vector<8x128xf32>
    %13 = tpu.matmul %11, %12, %cst_9 {dimension_numbers = #tpu.dot_dimension_numbers<[1], [0], [0], [1], [0, 0, 1, 1], [], []>} : vector<8x128xf32>, vector<128x128xf32>, vector<8x128xf32> -> vector<8x128xf32>
    %c0_10 = arith.constant 0 : index
    %c0_11 = arith.constant 0 : index
    %14 = vector.load %arg5[%c0_10, %c0_11] : memref<1x128xf32, #tpu.memory_space<vmem>>, vector<1x128xf32>
    %15 = vector.broadcast %14 : vector<1x128xf32> to vector<8x128xf32>
    %16 = arith.addf %13, %15 : vector<8x128xf32>
    %cst_12 = arith.constant 0.000000e+00 : f32
    %17 = vector.broadcast %cst_12 : f32 to vector<8x128xf32>
    %18 = arith.maximumf %16, %17 : vector<8x128xf32>
    %c0_13 = arith.constant 0 : index
    %c0_14 = arith.constant 0 : index
    %19 = vector.load %arg6[%c0_13, %c0_14] : memref<128x4xf32, #tpu.memory_space<vmem>>, vector<128x4xf32>
    %cst_15 = arith.constant dense<0.000000e+00> : vector<8x4xf32>
    %20 = tpu.matmul %18, %19, %cst_15 {dimension_numbers = #tpu.dot_dimension_numbers<[1], [0], [0], [1], [0, 0, 1, 1], [], []>} : vector<8x128xf32>, vector<128x4xf32>, vector<8x4xf32> -> vector<8x4xf32>
    %c0_16 = arith.constant 0 : index
    %c0_17 = arith.constant 0 : index
    %21 = vector.load %arg7[%c0_16, %c0_17] : memref<1x4xf32, #tpu.memory_space<vmem>>, vector<1x4xf32>
    %22 = vector.broadcast %21 : vector<1x4xf32> to vector<8x4xf32>
    %23 = arith.addf %20, %22 : vector<8x4xf32>
    %c0_18 = arith.constant 0 : index
    %c0_19 = arith.constant 0 : index
    %24 = vector.load %arg8[%c0_18, %c0_19] : memref<8x4xf32, #tpu.memory_space<vmem>>, vector<8x4xf32>
    tpu.vector_store %arg8[%c0_18, %c0_19], %23 {strides = array<i32>} : memref<8x4xf32, #tpu.memory_space<vmem>>, vector<8x4xf32>,
    return
  }
  func.func @transform_0(%arg0: i32) -> (i32, i32) {
    %c0_i32 = arith.constant 0 : i32
    %c0_i32_0 = arith.constant 0 : i32
    return %arg0, %c0_i32 : i32, i32
  }
  func.func @transform_1(%arg0: i32) -> (i32, i32) {
    %c0_i32 = arith.constant 0 : i32
    %c0_i32_0 = arith.constant 0 : i32
    %c0_i32_1 = arith.constant 0 : i32
    return %c0_i32, %c0_i32_0 : i32, i32
  }
  func.func @transform_2(%arg0: i32) -> (i32, i32) {
    %c0_i32 = arith.constant 0 : i32
    %c0_i32_0 = arith.constant 0 : i32
    %c0_i32_1 = arith.constant 0 : i32
    return %c0_i32, %c0_i32_0 : i32, i32
  }
  func.func @transform_3(%arg0: i32) -> (i32, i32) {
    %c0_i32 = arith.constant 0 : i32
    %c0_i32_0 = arith.constant 0 : i32
    %c0_i32_1 = arith.constant 0 : i32
    return %c0_i32, %c0_i32_0 : i32, i32
  }
  func.func @transform_4(%arg0: i32) -> (i32, i32) {
    %c0_i32 = arith.constant 0 : i32
    %c0_i32_0 = arith.constant 0 : i32
    %c0_i32_1 = arith.constant 0 : i32
    return %c0_i32, %c0_i32_0 : i32, i32
  }
  func.func @transform_5(%arg0: i32) -> (i32, i32) {
    %c0_i32 = arith.constant 0 : i32
    %c0_i32_0 = arith.constant 0 : i32
    %c0_i32_1 = arith.constant 0 : i32
    return %c0_i32, %c0_i32_0 : i32, i32
  }
  func.func @transform_6(%arg0: i32) -> (i32, i32) {
    %c0_i32 = arith.constant 0 : i32
    %c0_i32_0 = arith.constant 0 : i32
    %c0_i32_1 = arith.constant 0 : i32
    return %c0_i32, %c0_i32_0 : i32, i32
  }
  func.func @transform_7(%arg0: i32) -> (i32, i32) {
    %c0_i32 = arith.constant 0 : i32
    %c0_i32_0 = arith.constant 0 : i32
    return %arg0, %c0_i32 : i32, i32
  }
}

</mosaic_0001>

<llo_original>
// kernel: qnetwork_dense_forward.1
$region0: #{qnetwork_dense_forward.1}
  #allocation0 [shape = 'u32[]', space=smem, size = 0x4, offset = 0x4, fixed_abs, tag = 'smem constant byte address 0x4 - core index']
  #allocation1 [shape = 'u32[72,128]{1,0:T(1,128)}', space=vmem, size = 0x9000, scoped, tag = 'internal scratch']
  %s0 = inlined_call_operand.vmem [shape: f32[8,37], index: 0, kind: input, shape index: {}]
  %s1 = inlined_call_operand.hbm [shape: f32[37,128], index: 1, kind: input, shape index: {}]
  %s2 = inlined_call_operand.vmem [shape: f32[1,128], index: 2, kind: input, shape index: {}]
  %s3 = inlined_call_operand.vmem [shape: f32[128,128], index: 3, kind: input, shape index: {}]
  %s4 = inlined_call_operand.vmem [shape: f32[1,128], index: 4, kind: input, shape index: {}]
  %s5 = inlined_call_operand.vmem [shape: f32[128,4], index: 5, kind: input, shape index: {}]
  %s6 = inlined_call_operand.vmem [shape: f32[1,4], index: 6, kind: input, shape index: {}]
  %s7 = inlined_call_operand.vmem [shape: f32[8,4], index: 7, kind: output, shape index: {}]
  %s8 = sld [smem:[#allocation0]]
  $region42: #{qnetwork_dense_forward.1} parent=0
    _
  %s10 = ssub.s32 1, %s8
  %s11 = scalar_select 0, %s10, %s8
  $region1: #{qnetwork_dense_forward.1} parent=0
    #allocation2 [shape = 'u8[20480]{0}', space=vmem, size = 0x5000, scoped, tag = 'input window, operand 1, single buffered']
    #allocation3 [shape = 's32[1]{0}', space=sflag, size = 0x4, scoped, tag = 'scoped memory for qnetwork_dense_forward.1']
    %12 = vsyncpa [#allocation3], 0
    // Predicated region
    $region2: #{qnetwork_dense_forward.1} parent=1 // pred_check
      _
    $region3: #{qnetwork_dense_forward.1} parent=1 // pred_check_branch
      %14 = sbr.rel (0) target = $region5
    $region4: #{qnetwork_dense_forward.1} parent=1 // pred_region
      _
    $region5: #{qnetwork_dense_forward.1} parent=1 // pred_fallthru
      _
    // Predicated region
    $region6: #{qnetwork_dense_forward.1} parent=1 // pred_check
      _
    $region7: #{qnetwork_dense_forward.1} parent=1 // pred_check_branch
      %16 = sbr.rel (0) target = $region9
    $region8: #{qnetwork_dense_forward.1} parent=1 // pred_region
      %18 = vsyncadd [#allocation3], 0
      %s19 = sshll.u32 %s1, 4
      %s20 = int_to_ptr.hbm [resolvable:$true] %s19
      %s21 = sshll.u32 [#allocation2], 4
      %s22 = int_to_ptr.vmem [resolvable:$true] %s21
      %27 = dma.hbm_to_vmem [thread:$0]  %s20, 640, %s22, [#allocation3], 128, 128, 8
    $region9: #{qnetwork_dense_forward.1} parent=1 // pred_fallthru
      _
    // Predicated region
    $region10: #{qnetwork_dense_forward.1} parent=1 // pred_check
      _
    $region11: #{qnetwork_dense_forward.1} parent=1 // pred_check_branch
      %29 = sbr.rel (0) target = $region13
    $region12: #{qnetwork_dense_forward.1} parent=1 // pred_region
      _
    $region13: #{qnetwork_dense_forward.1} parent=1 // pred_fallthru
      _
    // Predicated region
    $region14: #{qnetwork_dense_forward.1} parent=1 // pred_check
      _
    $region15: #{qnetwork_dense_forward.1} parent=1 // pred_check_branch
      %31 = sbr.rel (0) target = $region17
    $region16: #{qnetwork_dense_forward.1} parent=1 // pred_region
      _
    $region17: #{qnetwork_dense_forward.1} parent=1 // pred_fallthru
      _
    // Predicated region
    $region18: #{qnetwork_dense_forward.1} parent=1 // pred_check
      _
    $region19: #{qnetwork_dense_forward.1} parent=1 // pred_check_branch
      %33 = sbr.rel (0) target = $region21
    $region20: #{qnetwork_dense_forward.1} parent=1 // pred_region
      _
    $region21: #{qnetwork_dense_forward.1} parent=1 // pred_fallthru
      _
    // Predicated region
    $region22: #{qnetwork_dense_forward.1} parent=1 // pred_check
      _
    $region23: #{qnetwork_dense_forward.1} parent=1 // pred_check_branch
      %35 = sbr.rel (0) target = $region25
    $region24: #{qnetwork_dense_forward.1} parent=1 // pred_region
      _
    $region25: #{qnetwork_dense_forward.1} parent=1 // pred_fallthru
      _
    // Predicated region
    $region26: #{qnetwork_dense_forward.1} parent=1 // pred_check
      _
    $region27: #{qnetwork_dense_forward.1} parent=1 // pred_check_branch
      %37 = sbr.rel (0) target = $region29
    $region28: #{qnetwork_dense_forward.1} parent=1 // pred_region
      _
    $region29: #{qnetwork_dense_forward.1} parent=1 // pred_fallthru
      _
    // Predicated region
    $region30: #{qnetwork_dense_forward.1} parent=1 // pred_check
      _
    $region31: #{qnetwork_dense_forward.1} parent=1 // pred_check_branch
      %39 = sbr.rel (0) target = $region33
    $region32: #{qnetwork_dense_forward.1} parent=1 // pred_region
      %41 = dma.done [#allocation3], 640
    $region33: #{qnetwork_dense_forward.1} parent=1 // pred_fallthru
      _
    %v42 = vld [vmem:[%s0] sm:$0xff]
    %v43 = vld [vmem:[#allocation2] sm:$0xff]
    %v44 = vld [vmem:[#allocation2 + $0x8] sm:$0xff]
    %v45 = vld [vmem:[#allocation2 + $0x10] sm:$0xff]
    %v46 = vld [vmem:[#allocation2 + $0x18] sm:$0xff]
    %v47 = vld [vmem:[#allocation2 + $0x20] sm:$0x1f]
    %v48 = vld [vmem:[%s2] sm:$0x1]
    %v50 = vperm.slane %v48, 0
    %vm52 = vcmask 302080
    %v54 = vsel %vm52, %v42, 0
    %vm56 = vcmask 1044480
    %v58 = vsel %vm56, %v47, 0
    %60 = vmatpush.msra.mxu0 0.0
    %61 = vmatpush.msra.mxu0 0.0
    %62 = vmatpush.msra.mxu0 0.0
    %63 = vmatpush.msra.mxu0 0.0
    %64 = vmatpush.msra.mxu0 0.0
    %65 = vmatpush.msra.mxu0 0.0
    %66 = vmatpush.msra.mxu0 0.0
    %67 = vmatpush.msra.mxu0 0.0
    %68 = vmatpush.msra.mxu0 0.0
    %69 = vmatpush.msra.mxu0 0.0
    %70 = vmatpush.msra.mxu0 0.0
    %71 = vmatpush.msra.mxu0 %v58
    %72 = vmatpush.msra.mxu0 %v46
    %73 = vmatpush.msra.mxu0 %v45
    %74 = vmatpush.msra.mxu0 %v44
    %75 = vmatpush.msra.mxu0 %v43
    %76 = vmatmul.f32.gmra.mxu0 %v54
    %v77 = vpop.f32.mrf.mxu0
    %v78 = vadd.f32 %v50, %v77
    %79 = vdwg.mxu0
    %vm80 = vcmp.gt.f32.partialorder %v78, 0.0
    %v81 = vmul.f32 %v78, 1.442695
    %v82 = vpow.pop %v81
    %v83 = vsub.f32 %v82, 1.0
    %v84 = vsel %vm80, %v78, %v83
    %v85 = vld [vmem:[%s3] sm:$0xff]
    %v86 = vld [vmem:[%s3 + $0x8] sm:$0xff]
    %v87 = vld [vmem:[%s3 + $0x10] sm:$0xff]
    %v88 = vld [vmem:[%s3 + $0x18] sm:$0xff]
    %v89 = vld [vmem:[%s3 + $0x20] sm:$0xff]
    %v90 = vld [vmem:[%s3 + $0x28] sm:$0xff]
    %v91 = vld [vmem:[%s3 + $0x30] sm:$0xff]
    %v92 = vld [vmem:[%s3 + $0x38] sm:$0xff]
    %v93 = vld [vmem:[%s3 + $0x40] sm:$0xff]
    %v94 = vld [vmem:[%s3 + $0x48] sm:$0xff]
    %v95 = vld [vmem:[%s3 + $0x50] sm:$0xff]
    %v96 = vld [vmem:[%s3 + $0x58] sm:$0xff]
    %v97 = vld [vmem:[%s3 + $0x60] sm:$0xff]
    %v98 = vld [vmem:[%s3 + $0x68] sm:$0xff]
    %v99 = vld [vmem:[%s3 + $0x70] sm:$0xff]
    %v100 = vld [vmem:[%s3 + $0x78] sm:$0xff]
    %v101 = vld [vmem:[%s4] sm:$0x1]
    %v103 = vperm.slane %v101, 0
    %105 = vmatpush.msra.mxu0 %v100
    %106 = vmatpush.msra.mxu0 %v99
    %107 = vmatpush.msra.mxu0 %v98
    %108 = vmatpush.msra.mxu0 %v97
    %109 = vmatpush.msra.mxu0 %v96
    %110 = vmatpush.msra.mxu0 %v95
    %111 = vmatpush.msra.mxu0 %v94
    %112 = vmatpush.msra.mxu0 %v93
    %113 = vmatpush.msra.mxu0 %v92
    %114 = vmatpush.msra.mxu0 %v91
    %115 = vmatpush.msra.mxu0 %v90
    %116 = vmatpush.msra.mxu0 %v89
    %117 = vmatpush.msra.mxu0 %v88
    %118 = vmatpush.msra.mxu0 %v87
    %119 = vmatpush.msra.mxu0 %v86
    %120 = vmatpush.msra.mxu0 %v85
    %121 = vmatmul.f32.gmra.mxu0 %v84
    %v122 = vpop.f32.mrf.mxu0
    %v123 = vadd.f32 %v103, %v122
    %124 = vdwg.mxu0
    %v125 = vmax.f32 %v123, 0.0
    %v126 = vld [vmem:[%s5] sm:$0xff]
    %v127 = vld [vmem:[%s5 + $0x8] sm:$0xff]
    %v128 = vld [vmem:[%s5 + $0x10] sm:$0xff]
    %v129 = vld [vmem:[%s5 + $0x18] sm:$0xff]
    %v130 = vld [vmem:[%s5 + $0x20] sm:$0xff]
    %v131 = vld [vmem:[%s5 + $0x28] sm:$0xff]
    %v132 = vld [vmem:[%s5 + $0x30] sm:$0xff]
    %v133 = vld [vmem:[%s5 + $0x38] sm:$0xff]
    %v134 = vld [vmem:[%s5 + $0x40] sm:$0xff]
    %v135 = vld [vmem:[%s5 + $0x48] sm:$0xff]
    %v136 = vld [vmem:[%s5 + $0x50] sm:$0xff]
    %v137 = vld [vmem:[%s5 + $0x58] sm:$0xff]
    %v138 = vld [vmem:[%s5 + $0x60] sm:$0xff]
    %v139 = vld [vmem:[%s5 + $0x68] sm:$0xff]
    %v140 = vld [vmem:[%s5 + $0x70] sm:$0xff]
    %v141 = vld [vmem:[%s5 + $0x78] sm:$0xff]
    %v142 = vld [vmem:[%s6] sm:$0x1]
    %v144 = vperm.slane %v142, 0
    %146 = vmatpush.msra.mxu0 %v141
    %147 = vmatpush.msra.mxu0 %v140
    %148 = vmatpush.msra.mxu0 %v139
    %149 = vmatpush.msra.mxu0 %v138
    %150 = vmatpush.msra.mxu0 %v137
    %151 = vmatpush.msra.mxu0 %v136
    %152 = vmatpush.msra.mxu0 %v135
    %153 = vmatpush.msra.mxu0 %v134
    %154 = vmatpush.msra.mxu0 %v133
    %155 = vmatpush.msra.mxu0 %v132
    %156 = vmatpush.msra.mxu0 %v131
    %157 = vmatpush.msra.mxu0 %v130
    %158 = vmatpush.msra.mxu0 %v129
    %159 = vmatpush.msra.mxu0 %v128
    %160 = vmatpush.msra.mxu0 %v127
    %161 = vmatpush.msra.mxu0 %v126
    %162 = vmatmul.f32.gmra.mxu0 %v125
    %v163 = vpop.f32.mrf.mxu0
    %v164 = vadd.f32 %v144, %v163
    %165 = vdwg.mxu0
    %vm166 = vcmask 31744
    %167 = vst.msk [vmem:[%s7] sm:$0xff] %vm166, %v164
    // Predicated region
    $region34: #{qnetwork_dense_forward.1} parent=1 // pred_check
      _
    $region35: #{qnetwork_dense_forward.1} parent=1 // pred_check_branch
      %169 = sbr.rel (0) target = $region37
    $region36: #{qnetwork_dense_forward.1} parent=1 // pred_region
      _
    $region37: #{qnetwork_dense_forward.1} parent=1 // pred_fallthru
      _
    // Predicated region
    $region38: #{qnetwork_dense_forward.1} parent=1 // pred_check
      _
    $region39: #{qnetwork_dense_forward.1} parent=1 // pred_check_branch
      %171 = sbr.rel (0) target = $region41
    $region40: #{qnetwork_dense_forward.1} parent=1 // pred_region
      _
    $region41: #{qnetwork_dense_forward.1} parent=1 // pred_fallthru
      _
    %172 = vsyncpa [#allocation3], 1

</llo_original>
